<compile_context>
chip_gen: v5e
topology: v5e:2x2
jax: 0.10.0
libtpu: 0.0.40
codegen_flags: <defaults>
</compile_context>

<pallas_src>
import jax
import jax.numpy as jnp
from jax.experimental import pallas as pl
from jax.experimental.pallas import tpu as pltpu


def _round_up(x, m):
    return ((x + m - 1) // m) * m


def _linear_kernel(x_ref, w_ref, b_ref, o_ref, acc_ref):
    """One (tm, tn) output tile; K is the innermost ("arbitrary") grid axis."""
    k = pl.program_id(2)

    @pl.when(k == 0)
    def _():
        acc_ref[...] = jnp.zeros_like(acc_ref)

    # bf16 x bf16 -> f32 accumulation on the MXU.
    acc_ref[...] += jnp.dot(
        x_ref[...], w_ref[...], preferred_element_type=jnp.float32
    )

    @pl.when(k == pl.num_programs(2) - 1)
    def _():
        # Bias add in f32 (epilogue math stays f32; v5e has no bf16 VPU).
        o_ref[...] = (acc_ref[...] + b_ref[...]).astype(o_ref.dtype)


def _choose_tiles(M, N, K):
    # Lane-dense (multiple-of-128) N/K tiles, sublane-aligned M tile.  Caps
    # keep double-buffered bf16 inputs + f32 out + f32 acc well under the
    # scoped-VMEM default even at the largest setting.
    tm = min(_round_up(M, 8), 256)
    tn = min(_round_up(N, 128), 256)
    tk = min(_round_up(K, 128), 512)
    return tm, tn, tk


@jax.jit
def pallas_linear(x, w, b_row):
    """y = x @ w + b via a tiled Pallas TPU matmul kernel.

    x:     (M, K)  any float dtype (cast to bf16 for the MXU)
    w:     (K, N)  bf16 (or castable)
    b_row: (1, N)  f32
    returns (M, N) f32
    """
    M, K = x.shape
    K2, N = w.shape
    assert K == K2, "inner dimensions must match"
    out_dtype = jnp.float32

    x = x.astype(jnp.bfloat16)
    w = w.astype(jnp.bfloat16)
    b_row = b_row.astype(jnp.float32).reshape(1, N)

    tm, tn, tk = _choose_tiles(M, N, K)
    Mp, Np, Kp = _round_up(M, tm), _round_up(N, tn), _round_up(K, tk)

    if (Mp, Kp) != (M, K):
        x = jnp.pad(x, ((0, Mp - M), (0, Kp - K)))
    if (Kp, Np) != (K, N):
        w = jnp.pad(w, ((0, Kp - K), (0, Np - N)))
    if Np != N:
        b_row = jnp.pad(b_row, ((0, 0), (0, Np - N)))

    grid = (Mp // tm, Np // tn, Kp // tk)

    cost = pl.CostEstimate(
        flops=2 * Mp * Np * Kp,
        transcendentals=0,
        bytes_accessed=2 * (Mp * Kp + Kp * Np) + 4 * (Mp * Np + Np),
    )

    out = pl.pallas_call(
        _linear_kernel,
        out_shape=jax.ShapeDtypeStruct((Mp, Np), out_dtype),
        grid=grid,
        in_specs=[
            pl.BlockSpec((tm, tk), lambda i, j, k: (i, k)),
            pl.BlockSpec((tk, tn), lambda i, j, k: (k, j)),
            pl.BlockSpec((1, tn), lambda i, j, k: (0, j)),
        ],
        out_specs=pl.BlockSpec((tm, tn), lambda i, j, k: (i, j)),
        scratch_shapes=[pltpu.VMEM((tm, tn), jnp.float32)],
        compiler_params=pltpu.CompilerParams(
            dimension_semantics=("parallel", "parallel", "arbitrary"),
        ),
        cost_estimate=cost,
    )(x, w, b_row)

    if (Mp, Np) != (M, N):
        out = out[:M, :N]
    return out


class TrainingSwitch:
    """JAX/Pallas port of trainingSwitch.

    forward() dispatches to trainModel when `self.training` is True,
    otherwise to evalModel — exactly like nn.Module.training flow control.
    Each sub-model is a Linear layer: params = (W[bf16, K x N], b[f32, 1 x N]).
    """

    def __init__(self, eval_params, train_params):
        self.eval_params = eval_params
        self.train_params = train_params
        self.training = True

    def train(self):
        self.training = True
        return self

    def eval(self):
        self.training = False
        return self

    def forward(self, x):
        # Static Python branch — same semantics as the PyTorch module.
        if self.training:
            w, b = self.train_params
        else:
            w, b = self.eval_params
        return pallas_linear(x, w, b)


def _make_linear_params(kw, kb, din, dout):
    # W stored as bf16 (MXU-native), bias as a (1, dout) f32 row so the
    # per-call path does no dtype/shape munging.
    w = (jax.random.normal(kw, (din, dout), dtype=jnp.float32) * 0.05).astype(
        jnp.bfloat16
    )
    b = jax.random.normal(kb, (1, dout), dtype=jnp.float32) * 0.05
    return w, b


if __name__ == "__main__":
    key = jax.random.PRNGKey(0)
    kx, ke_w, ke_b, kt_w, kt_b = jax.random.split(key, 5)

    # Small, lane-dense shapes: Din/Dout multiples of 128, batch multiple of 8.
    batch, din, dout = 8, 128, 128
    x = jax.random.normal(kx, (batch, din), dtype=jnp.float32)

    eval_params = _make_linear_params(ke_w, ke_b, din, dout)
    train_params = _make_linear_params(kt_w, kt_b, din, dout)

    model = TrainingSwitch(eval_params, train_params)

    # training mode -> trainModel path
    model.train()
    y_train = model.forward(x)
    jax.block_until_ready(y_train)

    # eval mode -> evalModel path
    model.eval()
    y_eval = model.forward(x)
    jax.block_until_ready(y_eval)

    # Plain-JAX references with identical bf16-in / f32-accum math.
    x_bf16 = x.astype(jnp.bfloat16)

    def ref_linear(params):
        w, b = params
        return jnp.dot(x_bf16, w, preferred_element_type=jnp.float32) + b

    ref_train = ref_linear(train_params)
    ref_eval = ref_linear(eval_params)

    assert jnp.allclose(y_train, ref_train, atol=1e-3, rtol=1e-3)
    assert jnp.allclose(y_eval, ref_eval, atol=1e-3, rtol=1e-3)
    assert not jnp.allclose(y_train, y_eval), "switch must select different models"

    print("KERNEL_OK")
</pallas_src>

<mosaic_0001>
module attributes {stable_mosaic.version = 11 : i64} {
  func.func @_linear_kernel(%arg0: i32, %arg1: i32, %arg2: i32, %arg3: memref<8x128xbf16, #tpu.memory_space<vmem>>, %arg4: memref<128x128xbf16, #tpu.memory_space<vmem>>, %arg5: memref<1x128xf32, #tpu.memory_space<vmem>>, %arg6: memref<8x128xf32, #tpu.memory_space<vmem>>, %arg7: memref<8x128xf32, #tpu.memory_space<vmem>>) attributes {dimension_semantics = [#tpu.dimension_semantics<parallel>, #tpu.dimension_semantics<parallel>, #tpu.dimension_semantics<arbitrary>], iteration_bounds = array<i64: 1, 1, 1>, scalar_prefetch = 0 : i64, scratch_operands = 1 : i64, tpu.core_type = #tpu.core_type<tc>, window_params = [{transform_indices = @transform_0, window_bounds = array<i64: 8, 128>}, {transform_indices = @transform_1, window_bounds = array<i64: 128, 128>}, {transform_indices = @transform_2, window_bounds = array<i64: 1, 128>}, {transform_indices = @transform_3, window_bounds = array<i64: 8, 128>}]} {
    %c0_i32 = arith.constant 0 : i32
    %0 = arith.cmpi eq, %arg2, %c0_i32 : i32
    %1 = arith.extui %0 : i1 to i32
    %c0_i32_0 = arith.constant 0 : i32
    %2 = arith.cmpi ne, %1, %c0_i32_0 : i32
    scf.if %2 {
      %cst_10 = arith.constant 0.000000e+00 : f32
      %12 = vector.broadcast %cst_10 : f32 to vector<8x128xf32>
      %c0_11 = arith.constant 0 : index
      %c0_12 = arith.constant 0 : index
      %13 = vector.load %arg7[%c0_11, %c0_12] : memref<8x128xf32, #tpu.memory_space<vmem>>, vector<8x128xf32>
      tpu.vector_store %arg7[%c0_11, %c0_12], %12 {strides = array<i32>} : memref<8x128xf32, #tpu.memory_space<vmem>>, vector<8x128xf32>,
    } else {
    }
    %c0 = arith.constant 0 : index
    %c0_1 = arith.constant 0 : index
    %3 = vector.load %arg7[%c0, %c0_1] : memref<8x128xf32, #tpu.memory_space<vmem>>, vector<8x128xf32>
    %c0_2 = arith.constant 0 : index
    %c0_3 = arith.constant 0 : index
    %4 = vector.load %arg3[%c0_2, %c0_3] : memref<8x128xbf16, #tpu.memory_space<vmem>>, vector<8x128xbf16>
    %c0_4 = arith.constant 0 : index
    %c0_5 = arith.constant 0 : index
    %5 = vector.load %arg4[%c0_4, %c0_5] : memref<128x128xbf16, #tpu.memory_space<vmem>>, vector<128x128xbf16>
    %cst = arith.constant dense<0.000000e+00> : vector<8x128xf32>
    %6 = tpu.matmul %4, %5, %cst {dimension_numbers = #tpu.dot_dimension_numbers<[1], [0], [0], [1], [0, 0, 1, 1], [], []>} : vector<8x128xbf16>, vector<128x128xbf16>, vector<8x128xf32> -> vector<8x128xf32>
    %7 = arith.addf %3, %6 : vector<8x128xf32>
    %c0_6 = arith.constant 0 : index
    %c0_7 = arith.constant 0 : index
    %8 = vector.load %arg7[%c0_6, %c0_7] : memref<8x128xf32, #tpu.memory_space<vmem>>, vector<8x128xf32>
    tpu.vector_store %arg7[%c0_6, %c0_7], %7 {strides = array<i32>} : memref<8x128xf32, #tpu.memory_space<vmem>>, vector<8x128xf32>,
    %c0_i32_8 = arith.constant 0 : i32
    %9 = arith.cmpi eq, %arg2, %c0_i32_8 : i32
    %10 = arith.extui %9 : i1 to i32
    %c0_i32_9 = arith.constant 0 : i32
    %11 = arith.cmpi ne, %10, %c0_i32_9 : i32
    scf.if %11 {
      %c0_10 = arith.constant 0 : index
      %c0_11 = arith.constant 0 : index
      %12 = vector.load %arg7[%c0_10, %c0_11] : memref<8x128xf32, #tpu.memory_space<vmem>>, vector<8x128xf32>
      %c0_12 = arith.constant 0 : index
      %c0_13 = arith.constant 0 : index
      %13 = vector.load %arg5[%c0_12, %c0_13] : memref<1x128xf32, #tpu.memory_space<vmem>>, vector<1x128xf32>
      %14 = vector.broadcast %13 : vector<1x128xf32> to vector<8x128xf32>
      %15 = arith.addf %12, %14 : vector<8x128xf32>
      %c0_14 = arith.constant 0 : index
      %c0_15 = arith.constant 0 : index
      %16 = vector.load %arg6[%c0_14, %c0_15] : memref<8x128xf32, #tpu.memory_space<vmem>>, vector<8x128xf32>
      tpu.vector_store %arg6[%c0_14, %c0_15], %15 {strides = array<i32>} : memref<8x128xf32, #tpu.memory_space<vmem>>, vector<8x128xf32>,
    } else {
    }
    return
  }
  func.func @transform_0(%arg0: i32, %arg1: i32, %arg2: i32) -> (i32, i32) {
    %c0_i32 = arith.constant 0 : i32
    return %arg0, %arg2 : i32, i32
  }
  func.func @transform_1(%arg0: i32, %arg1: i32, %arg2: i32) -> (i32, i32) {
    %c0_i32 = arith.constant 0 : i32
    return %arg2, %arg1 : i32, i32
  }
  func.func @transform_2(%arg0: i32, %arg1: i32, %arg2: i32) -> (i32, i32) {
    %c0_i32 = arith.constant 0 : i32
    %c0_i32_0 = arith.constant 0 : i32
    return %c0_i32, %arg1 : i32, i32
  }
  func.func @transform_3(%arg0: i32, %arg1: i32, %arg2: i32) -> (i32, i32) {
    %c0_i32 = arith.constant 0 : i32
    return %arg0, %arg1 : i32, i32
  }
}

</mosaic_0001>

<llo_original>
// kernel: pallas_linear.1
$region0: #{pallas_linear.1}
  #allocation0 [shape = 'u32[]', space=smem, size = 0x4, offset = 0x4, fixed_abs, tag = 'smem constant byte address 0x4 - core index']
  #allocation1 [shape = 'u32[72,128]{1,0:T(1,128)}', space=vmem, size = 0x9000, scoped, tag = 'internal scratch']
  #allocation2 [shape = 'f32[8,128]{1,0:T(8,128)}', space=vmem, size = 0x1000, scoped, tag = 'scratch operand']
  %s0 = inlined_call_operand.vmem [shape: bf16[8,128], index: 0, kind: input, shape index: {}]
  %s1 = inlined_call_operand.hbm [shape: bf16[128,128], index: 1, kind: input, shape index: {}]
  %s2 = inlined_call_operand.vmem [shape: f32[1,128], index: 2, kind: input, shape index: {}]
  %s3 = inlined_call_operand.hbm [shape: f32[8,128], index: 3, kind: output, shape index: {}]
  %s4 = sld [smem:[#allocation0]]
  $region34: #{pallas_linear.1} parent=0
    _
  %s6 = ssub.s32 1, %s4
  %s7 = scalar_select 0, %s6, %s4
  $region1: #{pallas_linear.1} parent=0
    #allocation3 [shape = 'u8[32768]{0}', space=vmem, size = 0x8000, scoped, tag = 'input window, operand 1, single buffered']
    #allocation4 [shape = 's32[1]{0}', space=sflag, size = 0x4, scoped, tag = 'scoped memory for pallas_linear.1']
    #allocation5 [shape = 's32[1]{0}', space=sflag, size = 0x4, scoped, tag = 'scoped memory for pallas_linear.1']
    #allocation6 [shape = 'u8[4096]{0}', space=vmem, size = 0x1000, scoped, tag = 'output window, operand 0, single buffered']
    %8 = vsyncpa [#allocation4], 0
    %9 = vsyncpa [#allocation5], 0
    // Predicated region
    $region2: #{pallas_linear.1} parent=1 // pred_check
      _
    $region3: #{pallas_linear.1} parent=1 // pred_check_branch
      %11 = sbr.rel (0) target = $region5
    $region4: #{pallas_linear.1} parent=1 // pred_region
      _
    $region5: #{pallas_linear.1} parent=1 // pred_fallthru
      _
    // Predicated region
    $region6: #{pallas_linear.1} parent=1 // pred_check
      _
    $region7: #{pallas_linear.1} parent=1 // pred_check_branch
      %13 = sbr.rel (0) target = $region9
    $region8: #{pallas_linear.1} parent=1 // pred_region
      %15 = vsyncadd [#allocation4], 0
      %s16 = sshll.u32 %s1, 4
      %s17 = int_to_ptr.hbm [resolvable:$true] %s16
      %s18 = sshll.u32 [#allocation3], 4
      %s19 = int_to_ptr.vmem [resolvable:$true] %s18
      %24 = dma.hbm_to_vmem [thread:$0]  %s17, 1024, %s19, [#allocation4], 64, 64, 4
    $region9: #{pallas_linear.1} parent=1 // pred_fallthru
      _
    // Predicated region
    $region10: #{pallas_linear.1} parent=1 // pred_check
      _
    $region11: #{pallas_linear.1} parent=1 // pred_check_branch
      %26 = sbr.rel (0) target = $region13
    $region12: #{pallas_linear.1} parent=1 // pred_region
      _
    $region13: #{pallas_linear.1} parent=1 // pred_fallthru
      _
    // Predicated region
    $region14: #{pallas_linear.1} parent=1 // pred_check
      _
    $region15: #{pallas_linear.1} parent=1 // pred_check_branch
      %28 = sbr.rel (0) target = $region17
    $region16: #{pallas_linear.1} parent=1 // pred_region
      %30 = dma.done [#allocation4], 1024
    $region17: #{pallas_linear.1} parent=1 // pred_fallthru
      _
    %p31 = scmp.eq.s32.totalorder 0, 0
    // Predicated region
    $region18: #{pallas_linear.1} parent=1 // pred_check
      %p32 = pneg %p31
    $region19: #{pallas_linear.1} parent=1 // pred_check_branch
      %34 = sbr.rel (%p32) target = $region21
    $region20: #{pallas_linear.1} parent=1 // pred_region
      %35 = vst [vmem:[#allocation2] sm:$0xff] 0.0
    $region21: #{pallas_linear.1} parent=1 // pred_fallthru
      _
    %v36 = vld [vmem:[#allocation2] sm:$0xff]
    %v37 = vld [vmem:[%s0] sm:$0xf]
    %v38 = vld [vmem:[#allocation3] sm:$0xf]
    %v39 = vld [vmem:[#allocation3 + $0x4] sm:$0xf]
    %v40 = vld [vmem:[#allocation3 + $0x8] sm:$0xf]
    %v41 = vld [vmem:[#allocation3 + $0xc] sm:$0xf]
    %v42 = vld [vmem:[#allocation3 + $0x10] sm:$0xf]
    %v43 = vld [vmem:[#allocation3 + $0x14] sm:$0xf]
    %v44 = vld [vmem:[#allocation3 + $0x18] sm:$0xf]
    %v45 = vld [vmem:[#allocation3 + $0x1c] sm:$0xf]
    %v46 = vld [vmem:[#allocation3 + $0x20] sm:$0xf]
    %v47 = vld [vmem:[#allocation3 + $0x24] sm:$0xf]
    %v48 = vld [vmem:[#allocation3 + $0x28] sm:$0xf]
    %v49 = vld [vmem:[#allocation3 + $0x2c] sm:$0xf]
    %v50 = vld [vmem:[#allocation3 + $0x30] sm:$0xf]
    %v51 = vld [vmem:[#allocation3 + $0x34] sm:$0xf]
    %v52 = vld [vmem:[#allocation3 + $0x38] sm:$0xf]
    %v53 = vld [vmem:[#allocation3 + $0x3c] sm:$0xf]
    %v70 = vunpack.c.l.b16 %v38
    %v71 = vunpack.c.l.b16 %v39
    %v72 = vunpack.c.l.b16 %v40
    %v73 = vunpack.c.l.b16 %v41
    %v74 = vunpack.c.l.b16 %v42
    %v75 = vunpack.c.l.b16 %v43
    %v76 = vunpack.c.l.b16 %v44
    %v77 = vunpack.c.l.b16 %v45
    %v78 = vunpack.c.l.b16 %v46
    %v79 = vunpack.c.l.b16 %v47
    %v80 = vunpack.c.l.b16 %v48
    %v81 = vunpack.c.l.b16 %v49
    %v82 = vunpack.c.l.b16 %v50
    %v83 = vunpack.c.l.b16 %v51
    %v84 = vunpack.c.l.b16 %v52
    %v85 = vunpack.c.l.b16 %v53
    %v86 = vpack.c.b16 %v71, %v70
    %v87 = vpack.c.b16 %v73, %v72
    %v88 = vpack.c.b16 %v75, %v74
    %v89 = vpack.c.b16 %v77, %v76
    %v90 = vpack.c.b16 %v79, %v78
    %v91 = vpack.c.b16 %v81, %v80
    %v92 = vpack.c.b16 %v83, %v82
    %v93 = vpack.c.b16 %v85, %v84
    %102 = vmatpush.bf16.msra.mxu0 %v93
    %103 = vmatpush.bf16.msra.mxu0 %v92
    %104 = vmatpush.bf16.msra.mxu0 %v91
    %105 = vmatpush.bf16.msra.mxu0 %v90
    %106 = vmatpush.bf16.msra.mxu0 %v89
    %107 = vmatpush.bf16.msra.mxu0 %v88
    %108 = vmatpush.bf16.msra.mxu0 %v87
    %109 = vmatpush.bf16.msra.mxu0 %v86
    %110 = vmatmul.bf16.gmra.mxu0 %v37
    %v111 = vpop.f32.mrf.mxu0
    %v112 = vadd.f32 0.0, %v111
    %v113 = vpop.f32.mrf.mxu0
    %114 = vdwg.mxu0
    %v115 = vadd.f32 %v36, %v112
    %116 = vst [vmem:[#allocation2] sm:$0xff] %v115
    // Predicated region
    $region22: #{pallas_linear.1} parent=1 // pred_check
      %p117 = pneg %p31
    $region23: #{pallas_linear.1} parent=1 // pred_check_branch
      %119 = sbr.rel (%p117) target = $region25
    $region24: #{pallas_linear.1} parent=1 // pred_region
      %v120 = vld [vmem:[#allocation2] sm:$0xff]
      %v121 = vld [vmem:[%s2] sm:$0x1]
      %v123 = vperm.slane %v121, 0
      %v125 = vadd.f32 %v120, %v123
      %126 = vst [vmem:[#allocation6] sm:$0xff] %v125
    $region25: #{pallas_linear.1} parent=1 // pred_fallthru
      _
    // Predicated region
    $region26: #{pallas_linear.1} parent=1 // pred_check
      _
    $region27: #{pallas_linear.1} parent=1 // pred_check_branch
      %128 = sbr.rel (0) target = $region29
    $region28: #{pallas_linear.1} parent=1 // pred_region
      %130 = vsyncadd [#allocation5], 0
      %s132 = sshll.u32 [#allocation6], 4
      %s133 = int_to_ptr.vmem [resolvable:$true] %s132
      %s134 = sshll.u32 %s3, 4
      %s135 = int_to_ptr.hbm [resolvable:$true] %s134
      %137 = dma.vmem_to_hbm [thread:$0]  %s133, 128, %s135, [#allocation5]
    $region29: #{pallas_linear.1} parent=1 // pred_fallthru
      _
    // Predicated region
    $region30: #{pallas_linear.1} parent=1 // pred_check
      _
    $region31: #{pallas_linear.1} parent=1 // pred_check_branch
      %139 = sbr.rel (0) target = $region33
    $region32: #{pallas_linear.1} parent=1 // pred_region
      %141 = dma.done [#allocation5], 128
    $region33: #{pallas_linear.1} parent=1 // pred_fallthru
      _
    %142 = vsyncpa [#allocation4], 1
    %143 = vsyncpa [#allocation5], 1

</llo_original>
